<compile_context>
chip_gen: v7x
topology: tpu7x:2x2x1
jax: 0.10.0
libtpu: 0.0.40
codegen_flags: <defaults>
</compile_context>

<pallas_src>
import jax
import jax.numpy as jnp
from jax.experimental import pallas as pl
from jax.experimental.pallas import tpu as pltpu

LANE = 128
SUBLANE_BF16 = 16


def _round_up(v, m):
    return ((v + m - 1) // m) * m


def _choose_tb(b):
    # Whole batch in one tile when small; cap at 512 (multiple of 128 so multi-
    # tile output stores stay lane-dense, and large B gets >=2 parallel grid
    # steps for v7x megacore).
    if b <= 512:
        return max(SUBLANE_BF16, _round_up(b, SUBLANE_BF16))
    return 512


def regressor_head(x, params, *, tb=None):
    """Fused 4-layer MLP head. x: (B, D) float32 -> (B, out_dim) float32."""
    B, D = x.shape
    d1, d2, d3 = max(D // 2, 1), max(D // 4, 1), max(D // 8, 1)
    out_dim = params["w4"].shape[1]

    # Per-layer padding: hidden widths to 128 lanes, final (transposed) weight
    # rows to a small sublane multiple.
    NP1, NP2, NP3 = (_round_up(d, LANE) for d in (d1, d2, d3))
    ODP = _round_up(out_dim, SUBLANE_BF16)

    TB = _choose_tb(B) if tb is None else max(SUBLANE_BF16, _round_up(tb, SUBLANE_BF16))
    n_tiles = pl.cdiv(B, TB)
    B_pad = n_tiles * TB

    f32, bf16 = jnp.float32, jnp.bfloat16

    def pad2(a, rows, cols, dtype):
        r, c = a.shape
        return jnp.pad(a, ((0, rows - r), (0, cols - c))).astype(dtype)

    # Zero-padded weight columns + zero bias + ReLU keep padded lanes exactly 0
    # through every layer, so the padding never leaks into real outputs.
    w1p = pad2(params["w1"], D,   NP1, bf16)     # (D,   NP1)  K stays natural D
    w2p = pad2(params["w2"], NP1, NP2, bf16)     # (NP1, NP2)
    w3p = pad2(params["w3"], NP2, NP3, bf16)     # (NP2, NP3)
    b1p = pad2(params["b1"], 1, NP1, f32)
    b2p = pad2(params["b2"], 1, NP2, f32)
    b3p = pad2(params["b3"], 1, NP3, f32)
    # Final layer in transposed orientation -> compact lane-dense output.
    w4t = pad2(params["w4"].T, ODP, NP3, bf16)   # (ODP, NP3)
    b4t = pad2(params["b4"].T, ODP, 1, f32)      # (ODP, 1)

    # Only a bf16 cast (+ batch pad if B % TB != 0); no padded HBM copy of x.
    x_in = x.astype(bf16)
    if B_pad != B:
        x_in = jnp.pad(x_in, ((0, B_pad - B), (0, 0)))

    def kernel(x_ref, w1_ref, b1_ref, w2_ref, b2_ref, w3_ref, b3_ref,
               w4t_ref, b4t_ref, out_ref):
        h = x_ref[...]                                               # (TB, D) bf16
        # Linear -> bias -> ReLU (x3): bf16 operands, f32 accumulation.
        a = jnp.dot(h, w1_ref[...], preferred_element_type=f32) + b1_ref[...]
        h = jnp.maximum(a, 0.0).astype(bf16)                         # (TB, NP1)
        a = jnp.dot(h, w2_ref[...], preferred_element_type=f32) + b2_ref[...]
        h = jnp.maximum(a, 0.0).astype(bf16)                         # (TB, NP2)
        a = jnp.dot(h, w3_ref[...], preferred_element_type=f32) + b3_ref[...]
        h = jnp.maximum(a, 0.0).astype(bf16)                         # (TB, NP3)
        # TODO(synk): training-mode Dropout not implemented (eval-mode identity).
        # Final Linear, transposed: (ODP, NP3) x (TB, NP3)^T -> (ODP, TB) so the
        # batch lands in the lane dimension (compact, lane-dense store).
        yt = jax.lax.dot_general(
            w4t_ref[...], h,
            dimension_numbers=(((1,), (1,)), ((), ())),
            preferred_element_type=f32)
        yt = yt + b4t_ref[...]                                       # (ODP, 1) bcast
        out_ref[...] = yt[:out_dim, :].astype(out_ref.dtype)         # (out_dim, TB)

    weight_bytes = sum(int(a.size) * a.dtype.itemsize
                       for a in (w1p, w2p, w3p, w4t, b1p, b2p, b3p, b4t))
    io_bytes = 2 * TB * D * 2 + 2 * TB * out_dim * 4      # double-buffered x / out
    act_bytes = TB * (NP1 + NP2 + NP3) * (4 + 2)          # f32 acc + bf16 act
    vmem_limit = int(min(64 * 2**20,
                         max(16 * 2**20,
                             int(1.5 * (weight_bytes + io_bytes + act_bytes)))))

    # FLOPs actually issued (padded shapes), not the logical unpadded count.
    flops = 2 * B_pad * (D * NP1 + NP1 * NP2 + NP2 * NP3 + NP3 * ODP)
    bytes_accessed = B_pad * D * 2 + weight_bytes + out_dim * B_pad * 4

    out = pl.pallas_call(
        kernel,
        out_shape=jax.ShapeDtypeStruct((out_dim, B_pad), x.dtype),
        grid=(n_tiles,),
        in_specs=[
            pl.BlockSpec((TB, D), lambda i: (i, 0)),       # x: advances with grid
            pl.BlockSpec((D, NP1), lambda i: (0, 0)),      # weights/biases:
            pl.BlockSpec((1, NP1), lambda i: (0, 0)),      # constant block index
            pl.BlockSpec((NP1, NP2), lambda i: (0, 0)),    # -> single DMA, stay
            pl.BlockSpec((1, NP2), lambda i: (0, 0)),      # VMEM-resident
            pl.BlockSpec((NP2, NP3), lambda i: (0, 0)),
            pl.BlockSpec((1, NP3), lambda i: (0, 0)),
            pl.BlockSpec((ODP, NP3), lambda i: (0, 0)),
            pl.BlockSpec((ODP, 1), lambda i: (0, 0)),
        ],
        out_specs=pl.BlockSpec((out_dim, TB), lambda i: (0, i)),  # compact output
        compiler_params=pltpu.CompilerParams(
            dimension_semantics=("parallel",),
            vmem_limit_bytes=vmem_limit,
        ),
        cost_estimate=pl.CostEstimate(
            flops=flops, transcendentals=0, bytes_accessed=bytes_accessed),
    )(x_in, w1p, b1p, w2p, b2p, w3p, b3p, w4t, b4t)

    return out[:, :B].T                                    # (B, out_dim)


def init_params(key, input_dim, output_dim=1):
    """Deterministic synthetic parameters (shapes match the PyTorch module)."""
    dims = [input_dim, input_dim // 2, input_dim // 4, input_dim // 8, output_dim]
    params = {}
    for i in range(4):
        key, kw, kb = jax.random.split(key, 3)
        d_in, d_out = dims[i], dims[i + 1]
        bound = 1.0 / jnp.sqrt(d_in)  # mimic PyTorch Linear default init scale
        params[f"w{i+1}"] = jax.random.uniform(
            kw, (d_in, d_out), jnp.float32, minval=-bound, maxval=bound)
        params[f"b{i+1}"] = jax.random.uniform(
            kb, (1, d_out), jnp.float32, minval=-bound, maxval=bound)
    return params


def reference_forward(x, params):
    """Mirrors the kernel's numerics: bf16 inputs/weights, f32 accumulation."""
    def lin(h, w, b):
        hf = h.astype(jnp.bfloat16).astype(jnp.float32)
        wf = w.astype(jnp.bfloat16).astype(jnp.float32)
        return jnp.dot(hf, wf, precision=jax.lax.Precision.HIGHEST) + b

    h = jnp.maximum(lin(x, params["w1"], params["b1"]), 0.0)
    h = jnp.maximum(lin(h, params["w2"], params["b2"]), 0.0)
    h = jnp.maximum(lin(h, params["w3"], params["b3"]), 0.0)
    return lin(h, params["w4"], params["b4"])


if __name__ == "__main__":
    key = jax.random.PRNGKey(0)
    key, kx = jax.random.split(key)

    B, D = 16, 64          # batch=16, n_features=64 -> hidden 32/16/8 -> out 1
    x = jax.random.normal(kx, (B, D), dtype=jnp.float32)
    params = init_params(key, input_dim=D, output_dim=1)

    out = regressor_head(x, params)     # auto: TB=16, grid=(1,)
    out = jax.block_until_ready(out)

    ref = reference_forward(x, params)
    assert out.shape == (B, 1), out.shape
    assert jnp.allclose(out, ref, atol=1e-3, rtol=1e-3), "mismatch vs reference"

    print("KERNEL_OK")
</pallas_src>

<mosaic_0001>
module attributes {stable_mosaic.version = 11 : i64} {
  func.func @kernel(%arg0: i32, %arg1: memref<16x64xbf16, #tpu.memory_space<vmem>>, %arg2: memref<64x128xbf16, #tpu.memory_space<vmem>>, %arg3: memref<1x128xf32, #tpu.memory_space<vmem>>, %arg4: memref<128x128xbf16, #tpu.memory_space<vmem>>, %arg5: memref<1x128xf32, #tpu.memory_space<vmem>>, %arg6: memref<128x128xbf16, #tpu.memory_space<vmem>>, %arg7: memref<1x128xf32, #tpu.memory_space<vmem>>, %arg8: memref<16x128xbf16, #tpu.memory_space<vmem>>, %arg9: memref<16x1xf32, #tpu.memory_space<vmem>>, %arg10: memref<1x16xf32, #tpu.memory_space<vmem>>) attributes {dimension_semantics = [#tpu.dimension_semantics<parallel>], iteration_bounds = array<i64: 1>, scalar_prefetch = 0 : i64, scratch_operands = 0 : i64, tpu.core_type = #tpu.core_type<tc>, window_params = [{transform_indices = @transform_0, window_bounds = array<i64: 16, 64>}, {pipeline_mode = #tpu.pipeline_mode<synchronous>, transform_indices = @transform_1, window_bounds = array<i64: 64, 128>}, {pipeline_mode = #tpu.pipeline_mode<synchronous>, transform_indices = @transform_2, window_bounds = array<i64: 1, 128>}, {pipeline_mode = #tpu.pipeline_mode<synchronous>, transform_indices = @transform_3, window_bounds = array<i64: 128, 128>}, {pipeline_mode = #tpu.pipeline_mode<synchronous>, transform_indices = @transform_4, window_bounds = array<i64: 1, 128>}, {pipeline_mode = #tpu.pipeline_mode<synchronous>, transform_indices = @transform_5, window_bounds = array<i64: 128, 128>}, {pipeline_mode = #tpu.pipeline_mode<synchronous>, transform_indices = @transform_6, window_bounds = array<i64: 1, 128>}, {pipeline_mode = #tpu.pipeline_mode<synchronous>, transform_indices = @transform_7, window_bounds = array<i64: 16, 128>}, {pipeline_mode = #tpu.pipeline_mode<synchronous>, transform_indices = @transform_8, window_bounds = array<i64: 16, 1>}, {transform_indices = @transform_9, window_bounds = array<i64: 1, 16>}]} {
    %c0 = arith.constant 0 : index
    %c0_0 = arith.constant 0 : index
    %0 = vector.load %arg1[%c0, %c0_0] : memref<16x64xbf16, #tpu.memory_space<vmem>>, vector<16x64xbf16>
    %c0_1 = arith.constant 0 : index
    %c0_2 = arith.constant 0 : index
    %1 = vector.load %arg2[%c0_1, %c0_2] : memref<64x128xbf16, #tpu.memory_space<vmem>>, vector<64x128xbf16>
    %cst = arith.constant dense<0.000000e+00> : vector<16x128xf32>
    %2 = tpu.matmul %0, %1, %cst {dimension_numbers = #tpu.dot_dimension_numbers<[1], [0], [0], [1], [0, 0, 1, 1], [], []>} : vector<16x64xbf16>, vector<64x128xbf16>, vector<16x128xf32> -> vector<16x128xf32>
    %c0_3 = arith.constant 0 : index
    %c0_4 = arith.constant 0 : index
    %3 = vector.load %arg3[%c0_3, %c0_4] : memref<1x128xf32, #tpu.memory_space<vmem>>, vector<1x128xf32>
    %4 = vector.broadcast %3 : vector<1x128xf32> to vector<16x128xf32>
    %5 = arith.addf %2, %4 : vector<16x128xf32>
    %cst_5 = arith.constant 0.000000e+00 : f32
    %6 = vector.broadcast %cst_5 : f32 to vector<16x128xf32>
    %7 = arith.maximumf %5, %6 : vector<16x128xf32>
    %8 = arith.truncf %7 : vector<16x128xf32> to vector<16x128xbf16>
    %c0_6 = arith.constant 0 : index
    %c0_7 = arith.constant 0 : index
    %9 = vector.load %arg4[%c0_6, %c0_7] : memref<128x128xbf16, #tpu.memory_space<vmem>>, vector<128x128xbf16>
    %cst_8 = arith.constant dense<0.000000e+00> : vector<16x128xf32>
    %10 = tpu.matmul %8, %9, %cst_8 {dimension_numbers = #tpu.dot_dimension_numbers<[1], [0], [0], [1], [0, 0, 1, 1], [], []>} : vector<16x128xbf16>, vector<128x128xbf16>, vector<16x128xf32> -> vector<16x128xf32>
    %c0_9 = arith.constant 0 : index
    %c0_10 = arith.constant 0 : index
    %11 = vector.load %arg5[%c0_9, %c0_10] : memref<1x128xf32, #tpu.memory_space<vmem>>, vector<1x128xf32>
    %12 = vector.broadcast %11 : vector<1x128xf32> to vector<16x128xf32>
    %13 = arith.addf %10, %12 : vector<16x128xf32>
    %cst_11 = arith.constant 0.000000e+00 : f32
    %14 = vector.broadcast %cst_11 : f32 to vector<16x128xf32>
    %15 = arith.maximumf %13, %14 : vector<16x128xf32>
    %16 = arith.truncf %15 : vector<16x128xf32> to vector<16x128xbf16>
    %c0_12 = arith.constant 0 : index
    %c0_13 = arith.constant 0 : index
    %17 = vector.load %arg6[%c0_12, %c0_13] : memref<128x128xbf16, #tpu.memory_space<vmem>>, vector<128x128xbf16>
    %cst_14 = arith.constant dense<0.000000e+00> : vector<16x128xf32>
    %18 = tpu.matmul %16, %17, %cst_14 {dimension_numbers = #tpu.dot_dimension_numbers<[1], [0], [0], [1], [0, 0, 1, 1], [], []>} : vector<16x128xbf16>, vector<128x128xbf16>, vector<16x128xf32> -> vector<16x128xf32>
    %c0_15 = arith.constant 0 : index
    %c0_16 = arith.constant 0 : index
    %19 = vector.load %arg7[%c0_15, %c0_16] : memref<1x128xf32, #tpu.memory_space<vmem>>, vector<1x128xf32>
    %20 = vector.broadcast %19 : vector<1x128xf32> to vector<16x128xf32>
    %21 = arith.addf %18, %20 : vector<16x128xf32>
    %cst_17 = arith.constant 0.000000e+00 : f32
    %22 = vector.broadcast %cst_17 : f32 to vector<16x128xf32>
    %23 = arith.maximumf %21, %22 : vector<16x128xf32>
    %24 = arith.truncf %23 : vector<16x128xf32> to vector<16x128xbf16>
    %c0_18 = arith.constant 0 : index
    %c0_19 = arith.constant 0 : index
    %25 = vector.load %arg8[%c0_18, %c0_19] : memref<16x128xbf16, #tpu.memory_space<vmem>>, vector<16x128xbf16>
    %cst_20 = arith.constant dense<0.000000e+00> : vector<16x16xf32>
    %26 = tpu.matmul %25, %24, %cst_20 {dimension_numbers = #tpu.dot_dimension_numbers<[1], [1], [0], [0], [0, 0, 1, 0], [], []>} : vector<16x128xbf16>, vector<16x128xbf16>, vector<16x16xf32> -> vector<16x16xf32>
    %c0_21 = arith.constant 0 : index
    %c0_22 = arith.constant 0 : index
    %27 = vector.load %arg9[%c0_21, %c0_22] : memref<16x1xf32, #tpu.memory_space<vmem>>, vector<16x1xf32>
    %28 = vector.broadcast %27 : vector<16x1xf32> to vector<16x16xf32>
    %29 = arith.addf %26, %28 : vector<16x16xf32>
    %30 = vector.extract_strided_slice %29 {offsets = [0, 0], sizes = [1, 16], strides = [1, 1]} : vector<16x16xf32> to vector<1x16xf32>
    %c0_23 = arith.constant 0 : index
    %c0_24 = arith.constant 0 : index
    %31 = vector.load %arg10[%c0_23, %c0_24] : memref<1x16xf32, #tpu.memory_space<vmem>>, vector<1x16xf32>
    tpu.vector_store %arg10[%c0_23, %c0_24], %30 {strides = array<i32>} : memref<1x16xf32, #tpu.memory_space<vmem>>, vector<1x16xf32>,
    return
  }
  func.func @transform_0(%arg0: i32) -> (i32, i32) {
    %c0_i32 = arith.constant 0 : i32
    %c0_i32_0 = arith.constant 0 : i32
    return %arg0, %c0_i32 : i32, i32
  }
  func.func @transform_1(%arg0: i32) -> (i32, i32) {
    %c0_i32 = arith.constant 0 : i32
    %c0_i32_0 = arith.constant 0 : i32
    %c0_i32_1 = arith.constant 0 : i32
    return %c0_i32, %c0_i32_0 : i32, i32
  }
  func.func @transform_2(%arg0: i32) -> (i32, i32) {
    %c0_i32 = arith.constant 0 : i32
    %c0_i32_0 = arith.constant 0 : i32
    %c0_i32_1 = arith.constant 0 : i32
    return %c0_i32, %c0_i32_0 : i32, i32
  }
  func.func @transform_3(%arg0: i32) -> (i32, i32) {
    %c0_i32 = arith.constant 0 : i32
    %c0_i32_0 = arith.constant 0 : i32
    %c0_i32_1 = arith.constant 0 : i32
    return %c0_i32, %c0_i32_0 : i32, i32
  }
  func.func @transform_4(%arg0: i32) -> (i32, i32) {
    %c0_i32 = arith.constant 0 : i32
    %c0_i32_0 = arith.constant 0 : i32
    %c0_i32_1 = arith.constant 0 : i32
    return %c0_i32, %c0_i32_0 : i32, i32
  }
  func.func @transform_5(%arg0: i32) -> (i32, i32) {
    %c0_i32 = arith.constant 0 : i32
    %c0_i32_0 = arith.constant 0 : i32
    %c0_i32_1 = arith.constant 0 : i32
    return %c0_i32, %c0_i32_0 : i32, i32
  }
  func.func @transform_6(%arg0: i32) -> (i32, i32) {
    %c0_i32 = arith.constant 0 : i32
    %c0_i32_0 = arith.constant 0 : i32
    %c0_i32_1 = arith.constant 0 : i32
    return %c0_i32, %c0_i32_0 : i32, i32
  }
  func.func @transform_7(%arg0: i32) -> (i32, i32) {
    %c0_i32 = arith.constant 0 : i32
    %c0_i32_0 = arith.constant 0 : i32
    %c0_i32_1 = arith.constant 0 : i32
    return %c0_i32, %c0_i32_0 : i32, i32
  }
  func.func @transform_8(%arg0: i32) -> (i32, i32) {
    %c0_i32 = arith.constant 0 : i32
    %c0_i32_0 = arith.constant 0 : i32
    %c0_i32_1 = arith.constant 0 : i32
    return %c0_i32, %c0_i32_0 : i32, i32
  }
  func.func @transform_9(%arg0: i32) -> (i32, i32) {
    %c0_i32 = arith.constant 0 : i32
    %c0_i32_0 = arith.constant 0 : i32
    return %c0_i32, %arg0 : i32, i32
  }
}

</mosaic_0001>

<llo_original>
// kernel: tpu_custom_call.1
$region0: #{tpu_custom_call.1}
  #allocation0 [shape = 'u32[]', space=smem, size = 0x4, offset = 0x4, fixed_abs, tag = 'smem constant byte address 0x4 - core index']
  #allocation1 [shape = 'u32[144,128]{1,0:T(1,128)}', space=vmem, size = 0x12000, scoped, tag = 'internal scratch']
  %s0 = inlined_call_operand.vmem [shape: bf16[16,64], index: 0, kind: input, shape index: {}]
  %s1 = inlined_call_operand.hbm [shape: bf16[64,128], index: 1, kind: input, shape index: {}]
  %s2 = inlined_call_operand.vmem [shape: f32[1,128], index: 2, kind: input, shape index: {}]
  %s3 = inlined_call_operand.hbm [shape: bf16[128,128], index: 3, kind: input, shape index: {}]
  %s4 = inlined_call_operand.vmem [shape: f32[1,128], index: 4, kind: input, shape index: {}]
  %s5 = inlined_call_operand.hbm [shape: bf16[128,128], index: 5, kind: input, shape index: {}]
  %s6 = inlined_call_operand.vmem [shape: f32[1,128], index: 6, kind: input, shape index: {}]
  %s7 = inlined_call_operand.vmem [shape: bf16[16,128], index: 7, kind: input, shape index: {}]
  %s8 = inlined_call_operand.vmem [shape: f32[16,1], index: 8, kind: input, shape index: {}]
  %s9 = inlined_call_operand.hbm [shape: f32[1,16], index: 9, kind: output, shape index: {}]
  %s10 = sld [smem:[#allocation0]]
  $region58: #{tpu_custom_call.1} parent=0
    _
  %s12 = ssub.s32 1, %s10
  %s13 = scalar_select 0, %s12, %s10
  $region1: #{tpu_custom_call.1} parent=0
    #allocation2 [shape = 'u8[16384]{0}', space=vmem, size = 0x4000, scoped, tag = 'input window, operand 1, single buffered']
    #allocation3 [shape = 's32[1]{0}', space=sflag, size = 0x4, scoped, tag = 'scoped memory for tpu_custom_call.1']
    #allocation4 [shape = 's32[1]{0}', space=sflag, size = 0x4, scoped, tag = 'scoped memory for tpu_custom_call.1']
    #allocation5 [shape = 'u8[32768]{0}', space=vmem, size = 0x8000, scoped, tag = 'input window, operand 3, single buffered']
    #allocation6 [shape = 's32[1]{0}', space=sflag, size = 0x4, scoped, tag = 'scoped memory for tpu_custom_call.1']
    #allocation7 [shape = 'u8[32768]{0}', space=vmem, size = 0x8000, scoped, tag = 'input window, operand 5, single buffered']
    #allocation8 [shape = 'u8[512]{0}', space=vmem, size = 0x400, scoped, tag = 'output window, operand 0, single buffered']
    %14 = vsyncpa [#allocation3], 0
    %15 = vsyncpa [#allocation6], 0
    %16 = vsyncpa [#allocation4], 0
    // Predicated region
    $region2: #{tpu_custom_call.1} parent=1 // pred_check
      _
    $region3: #{tpu_custom_call.1} parent=1 // pred_check_branch
      %18 = sbr.rel (0) target = $region5
    $region4: #{tpu_custom_call.1} parent=1 // pred_region
      _
    $region5: #{tpu_custom_call.1} parent=1 // pred_fallthru
      _
    // Predicated region
    $region6: #{tpu_custom_call.1} parent=1 // pred_check
      _
    $region7: #{tpu_custom_call.1} parent=1 // pred_check_branch
      %20 = sbr.rel (0) target = $region9
    $region8: #{tpu_custom_call.1} parent=1 // pred_region
      %s22 = ssub.s32 512, 512
      %23 = vsyncadd [#allocation3], %s22
      %s24 = sshll.u32 [#allocation2], 4
      %s25 = int_to_ptr.vmem [resolvable:$true] %s24
      %30 = dma.hbm_to_vmem [thread:$0]  %s1, 512, %s25, [#allocation3], 64, 64, 4
    $region9: #{tpu_custom_call.1} parent=1 // pred_fallthru
      _
    // Predicated region
    $region10: #{tpu_custom_call.1} parent=1 // pred_check
      _
    $region11: #{tpu_custom_call.1} parent=1 // pred_check_branch
      %32 = sbr.rel (0) target = $region13
    $region12: #{tpu_custom_call.1} parent=1 // pred_region
      _
    $region13: #{tpu_custom_call.1} parent=1 // pred_fallthru
      _
    // Predicated region
    $region14: #{tpu_custom_call.1} parent=1 // pred_check
      _
    $region15: #{tpu_custom_call.1} parent=1 // pred_check_branch
      %34 = sbr.rel (0) target = $region17
    $region16: #{tpu_custom_call.1} parent=1 // pred_region
      %s36 = ssub.s32 1024, 1024
      %37 = vsyncadd [#allocation6], %s36
      %s38 = sshll.u32 [#allocation5], 4
      %s39 = int_to_ptr.vmem [resolvable:$true] %s38
      %44 = dma.hbm_to_vmem [thread:$0]  %s3, 1024, %s39, [#allocation6], 64, 64, 4
    $region17: #{tpu_custom_call.1} parent=1 // pred_fallthru
      _
    // Predicated region
    $region18: #{tpu_custom_call.1} parent=1 // pred_check
      _
    $region19: #{tpu_custom_call.1} parent=1 // pred_check_branch
      %46 = sbr.rel (0) target = $region21
    $region20: #{tpu_custom_call.1} parent=1 // pred_region
      _
    $region21: #{tpu_custom_call.1} parent=1 // pred_fallthru
      _
    // Predicated region
    $region22: #{tpu_custom_call.1} parent=1 // pred_check
      _
    $region23: #{tpu_custom_call.1} parent=1 // pred_check_branch
      %48 = sbr.rel (0) target = $region25
    $region24: #{tpu_custom_call.1} parent=1 // pred_region
      %s50 = ssub.s32 1024, 1024
      %51 = vsyncadd [#allocation6], %s50
      %s52 = sshll.u32 [#allocation7], 4
      %s53 = int_to_ptr.vmem [resolvable:$true] %s52
      %58 = dma.hbm_to_vmem [thread:$0]  %s5, 1024, %s53, [#allocation6], 64, 64, 4
    $region25: #{tpu_custom_call.1} parent=1 // pred_fallthru
      _
    // Predicated region
    $region26: #{tpu_custom_call.1} parent=1 // pred_check
      _
    $region27: #{tpu_custom_call.1} parent=1 // pred_check_branch
      %60 = sbr.rel (0) target = $region29
    $region28: #{tpu_custom_call.1} parent=1 // pred_region
      _
    $region29: #{tpu_custom_call.1} parent=1 // pred_fallthru
      _
    // Predicated region
    $region30: #{tpu_custom_call.1} parent=1 // pred_check
      _
    $region31: #{tpu_custom_call.1} parent=1 // pred_check_branch
      %62 = sbr.rel (0) target = $region33
    $region32: #{tpu_custom_call.1} parent=1 // pred_region
      _
    $region33: #{tpu_custom_call.1} parent=1 // pred_fallthru
      _
    // Predicated region
    $region34: #{tpu_custom_call.1} parent=1 // pred_check
      _
    $region35: #{tpu_custom_call.1} parent=1 // pred_check_branch
      %64 = sbr.rel (0) target = $region37
    $region36: #{tpu_custom_call.1} parent=1 // pred_region
      _
    $region37: #{tpu_custom_call.1} parent=1 // pred_fallthru
      _
    // Predicated region
    $region38: #{tpu_custom_call.1} parent=1 // pred_check
      _
    $region39: #{tpu_custom_call.1} parent=1 // pred_check_branch
      %66 = sbr.rel (0) target = $region41
    $region40: #{tpu_custom_call.1} parent=1 // pred_region
      %67 = dma.done [#allocation3], 512
    $region41: #{tpu_custom_call.1} parent=1 // pred_fallthru
      _
    // Predicated region
    $region42: #{tpu_custom_call.1} parent=1 // pred_check
      _
    $region43: #{tpu_custom_call.1} parent=1 // pred_check_branch
      %69 = sbr.rel (0) target = $region45
    $region44: #{tpu_custom_call.1} parent=1 // pred_region
      %70 = dma.done [#allocation6], 1024
    $region45: #{tpu_custom_call.1} parent=1 // pred_fallthru
      _
    // Predicated region
    $region46: #{tpu_custom_call.1} parent=1 // pred_check
      _
    $region47: #{tpu_custom_call.1} parent=1 // pred_check_branch
      %72 = sbr.rel (0) target = $region49
    $region48: #{tpu_custom_call.1} parent=1 // pred_region
      %73 = dma.done [#allocation6], 1024
    $region49: #{tpu_custom_call.1} parent=1 // pred_fallthru
      _
    %v75 = vld [vmem:[%s0] sm:$0xf]
    %v76 = vld [vmem:[%s0 + $0x4] sm:$0xf]
    %v77 = vld [vmem:[#allocation2] sm:$0xf]
    %v78 = vld [vmem:[#allocation2 + $0x4] sm:$0xf]
    %v79 = vld [vmem:[#allocation2 + $0x8] sm:$0xf]
    %v80 = vld [vmem:[#allocation2 + $0xc] sm:$0xf]
    %v81 = vld [vmem:[#allocation2 + $0x10] sm:$0xf]
    %v82 = vld [vmem:[#allocation2 + $0x14] sm:$0xf]
    %v83 = vld [vmem:[#allocation2 + $0x18] sm:$0xf]
    %v84 = vld [vmem:[#allocation2 + $0x1c] sm:$0xf]
    %v85 = vld [vmem:[%s2] sm:$0x1]
    %v87 = vlaneseq
    %v88 = vshrl.u32 %v87, 7
    %v89 = vsub.s32 0, %v88
    %v90 = vrot.slane %v85, %v89
    %v94 = vunpack.c.l.b16 %v75
    %v95 = vunpack.c.l.b16 %v76
    %v96 = vpack.c.b16 %v95, %v94
    %v105 = vunpack.c.l.b16 %v77
    %v106 = vunpack.c.l.b16 %v78
    %v107 = vunpack.c.l.b16 %v79
    %v108 = vunpack.c.l.b16 %v80
    %v109 = vunpack.c.l.b16 %v81
    %v110 = vunpack.c.l.b16 %v82
    %v111 = vunpack.c.l.b16 %v83
    %v112 = vunpack.c.l.b16 %v84
    %v113 = vpack.c.b16 %v106, %v105
    %v114 = vpack.c.b16 %v108, %v107
    %v115 = vpack.c.b16 %v110, %v109
    %v116 = vpack.c.b16 %v112, %v111
    %vm121 = vcmask 523264
    %v123 = vsel %vm121, %v96, 0
    %125 = vmatprep.subr.bf16.mxu0 0
    %126 = vmatpush1.bf16.msra.mxu0 %v113
    %127 = vmatprep.subr.bf16.mxu0 0
    %128 = vmatpush1.bf16.msra.mxu0 %v114
    %129 = vmatprep.subr.bf16.mxu0 0
    %130 = vmatpush1.bf16.msra.mxu0 %v115
    %131 = vmatprep.subr.bf16.mxu0 0
    %132 = vmatpush1.bf16.msra.mxu0 %v116
    %133 = vmatprep.subr.bf16.mxu0 0
    %134 = vmatpush1.bf16.msra.mxu0 0
    %135 = vmatprep.subr.bf16.mxu0 0
    %136 = vmatpush1.bf16.msra.mxu0 0
    %137 = vmatprep.subr.bf16.mxu0 0
    %138 = vmatpush1.bf16.msra.mxu0 0
    %139 = vmatprep.subr.bf16.mxu0 0
    %140 = vmatpush1.bf16.msra.mxu0 0
    %141 = vmatprep.subr.bf16.mxu0 0
    %142 = vmatpush1.bf16.msra.mxu0 0
    %143 = vmatprep.subr.bf16.mxu0 0
    %144 = vmatpush1.bf16.msra.mxu0 0
    %145 = vmatprep.subr.bf16.mxu0 0
    %146 = vmatpush1.bf16.msra.mxu0 0
    %147 = vmatprep.subr.bf16.mxu0 0
    %148 = vmatpush1.bf16.msra.mxu0 0
    %149 = vmatprep.subr.bf16.mxu0 0
    %150 = vmatpush1.bf16.msra.mxu0 0
    %151 = vmatprep.subr.bf16.mxu0 0
    %152 = vmatpush1.bf16.msra.mxu0 0
    %153 = vmatprep.subr.bf16.mxu0 0
    %154 = vmatpush1.bf16.msra.mxu0 0
    %155 = vmatprep.subr.bf16.mxu0 0
    %156 = vmatpush1.bf16.msra.mxu0 0
    %157 = vmatprep.mubr.bf16.mxu0 0
    %158 = vmatmul.mubr.bf16.gmra.mrb[0].mxu0 %v123
    %v159 = vpop.f32.mrb[0].mxu0
    %v160 = vadd.f32 %v90, %v159
    %v161 = vpop.f32.mrb[0].mxu0
    %v162 = vpop.f32.mrb[0].mxu0
    %v163 = vadd.f32 %v90, %v162
    %v164 = vpop.f32.mrb[0].mxu0
    %165 = vdwg.mxu0
    %v166 = vmax.f32 %v160, 0.0
    %v167 = vmax.f32 %v163, 0.0
    %v168 = vpack.c.bf16 %v167, %v166
    %v169 = vld [vmem:[#allocation5] sm:$0xf]
    %v170 = vld [vmem:[#allocation5 + $0x4] sm:$0xf]
    %v171 = vld [vmem:[#allocation5 + $0x8] sm:$0xf]
    %v172 = vld [vmem:[#allocation5 + $0xc] sm:$0xf]
    %v173 = vld [vmem:[#allocation5 + $0x10] sm:$0xf]
    %v174 = vld [vmem:[#allocation5 + $0x14] sm:$0xf]
    %v175 = vld [vmem:[#allocation5 + $0x18] sm:$0xf]
    %v176 = vld [vmem:[#allocation5 + $0x1c] sm:$0xf]
    %v177 = vld [vmem:[#allocation5 + $0x20] sm:$0xf]
    %v178 = vld [vmem:[#allocation5 + $0x24] sm:$0xf]
    %v179 = vld [vmem:[#allocation5 + $0x28] sm:$0xf]
    %v180 = vld [vmem:[#allocation5 + $0x2c] sm:$0xf]
    %v181 = vld [vmem:[#allocation5 + $0x30] sm:$0xf]
    %v182 = vld [vmem:[#allocation5 + $0x34] sm:$0xf]
    %v183 = vld [vmem:[#allocation5 + $0x38] sm:$0xf]
    %v184 = vld [vmem:[#allocation5 + $0x3c] sm:$0xf]
    %v185 = vld [vmem:[%s4] sm:$0x1]
    %v187 = vlaneseq
    %v188 = vshrl.u32 %v187, 7
    %v189 = vsub.s32 0, %v188
    %v190 = vrot.slane %v185, %v189
    %v208 = vunpack.c.l.b16 %v169
    %v209 = vunpack.c.l.b16 %v170
    %v210 = vunpack.c.l.b16 %v171
    %v211 = vunpack.c.l.b16 %v172
    %v212 = vunpack.c.l.b16 %v173
    %v213 = vunpack.c.l.b16 %v174
    %v214 = vunpack.c.l.b16 %v175
    %v215 = vunpack.c.l.b16 %v176
    %v216 = vunpack.c.l.b16 %v177
    %v217 = vunpack.c.l.b16 %v178
    %v218 = vunpack.c.l.b16 %v179
    %v219 = vunpack.c.l.b16 %v180
    %v220 = vunpack.c.l.b16 %v181
    %v221 = vunpack.c.l.b16 %v182
    %v222 = vunpack.c.l.b16 %v183
    %v223 = vunpack.c.l.b16 %v184
    %v224 = vpack.c.b16 %v209, %v208
    %v225 = vpack.c.b16 %v211, %v210
    %v226 = vpack.c.b16 %v213, %v212
    %v227 = vpack.c.b16 %v215, %v214
    %v228 = vpack.c.b16 %v217, %v216
    %v229 = vpack.c.b16 %v219, %v218
    %v230 = vpack.c.b16 %v221, %v220
    %v231 = vpack.c.b16 %v223, %v222
    %240 = vmatprep.subr.bf16.mxu0 0
    %241 = vmatpush1.bf16.msra.mxu0 %v224
    %242 = vmatprep.subr.bf16.mxu0 0
    %243 = vmatpush1.bf16.msra.mxu0 %v225
    %244 = vmatprep.subr.bf16.mxu0 0
    %245 = vmatpush1.bf16.msra.mxu0 %v226
    %246 = vmatprep.subr.bf16.mxu0 0
    %247 = vmatpush1.bf16.msra.mxu0 %v227
    %248 = vmatprep.subr.bf16.mxu0 0
    %249 = vmatpush1.bf16.msra.mxu0 %v228
    %250 = vmatprep.subr.bf16.mxu0 0
    %251 = vmatpush1.bf16.msra.mxu0 %v229
    %252 = vmatprep.subr.bf16.mxu0 0
    %253 = vmatpush1.bf16.msra.mxu0 %v230
    %254 = vmatprep.subr.bf16.mxu0 0
    %255 = vmatpush1.bf16.msra.mxu0 %v231
    %256 = vmatprep.subr.bf16.mxu0 0
    %257 = vmatpush1.bf16.msra.mxu0 0
    %258 = vmatprep.subr.bf16.mxu0 0
    %259 = vmatpush1.bf16.msra.mxu0 0
    %260 = vmatprep.subr.bf16.mxu0 0
    %261 = vmatpush1.bf16.msra.mxu0 0
    %262 = vmatprep.subr.bf16.mxu0 0
    %263 = vmatpush1.bf16.msra.mxu0 0
    %264 = vmatprep.subr.bf16.mxu0 0
    %265 = vmatpush1.bf16.msra.mxu0 0
    %266 = vmatprep.subr.bf16.mxu0 0
    %267 = vmatpush1.bf16.msra.mxu0 0
    %268 = vmatprep.subr.bf16.mxu0 0
    %269 = vmatpush1.bf16.msra.mxu0 0
    %270 = vmatprep.subr.bf16.mxu0 0
    %271 = vmatpush1.bf16.msra.mxu0 0
    %272 = vmatprep.mubr.bf16.mxu0 0
    %273 = vmatmul.mubr.bf16.gmra.mrb[0].mxu0 %v168
    %v274 = vpop.f32.mrb[0].mxu0
    %v275 = vadd.f32 %v190, %v274
    %v276 = vpop.f32.mrb[0].mxu0
    %v277 = vpop.f32.mrb[0].mxu0
    %v278 = vadd.f32 %v190, %v277
    %v279 = vpop.f32.mrb[0].mxu0
    %280 = vdwg.mxu0
    %v281 = vmax.f32 %v275, 0.0
    %v282 = vmax.f32 %v278, 0.0
    %v283 = vpack.c.bf16 %v282, %v281
    %v284 = vld [vmem:[#allocation7] sm:$0xf]
    %v285 = vld [vmem:[#allocation7 + $0x4] sm:$0xf]
    %v286 = vld [vmem:[#allocation7 + $0x8] sm:$0xf]
    %v287 = vld [vmem:[#allocation7 + $0xc] sm:$0xf]
    %v288 = vld [vmem:[#allocation7 + $0x10] sm:$0xf]
    %v289 = vld [vmem:[#allocation7 + $0x14] sm:$0xf]
    %v290 = vld [vmem:[#allocation7 + $0x18] sm:$0xf]
    %v291 = vld [vmem:[#allocation7 + $0x1c] sm:$0xf]
    %v292 = vld [vmem:[#allocation7 + $0x20] sm:$0xf]
    %v293 = vld [vmem:[#allocation7 + $0x24] sm:$0xf]
    %v294 = vld [vmem:[#allocation7 + $0x28] sm:$0xf]
    %v295 = vld [vmem:[#allocation7 + $0x2c] sm:$0xf]
    %v296 = vld [vmem:[#allocation7 + $0x30] sm:$0xf]
    %v297 = vld [vmem:[#allocation7 + $0x34] sm:$0xf]
    %v298 = vld [vmem:[#allocation7 + $0x38] sm:$0xf]
    %v299 = vld [vmem:[#allocation7 + $0x3c] sm:$0xf]
    %v300 = vld [vmem:[%s6] sm:$0x1]
    %v302 = vlaneseq
    %v303 = vshrl.u32 %v302, 7
    %v304 = vsub.s32 0, %v303
    %v305 = vrot.slane %v300, %v304
    %v323 = vunpack.c.l.b16 %v284
    %v324 = vunpack.c.l.b16 %v285
    %v325 = vunpack.c.l.b16 %v286
    %v326 = vunpack.c.l.b16 %v287
    %v327 = vunpack.c.l.b16 %v288
    %v328 = vunpack.c.l.b16 %v289
    %v329 = vunpack.c.l.b16 %v290
    %v330 = vunpack.c.l.b16 %v291
    %v331 = vunpack.c.l.b16 %v292
    %v332 = vunpack.c.l.b16 %v293
    %v333 = vunpack.c.l.b16 %v294
    %v334 = vunpack.c.l.b16 %v295
    %v335 = vunpack.c.l.b16 %v296
    %v336 = vunpack.c.l.b16 %v297
    %v337 = vunpack.c.l.b16 %v298
    %v338 = vunpack.c.l.b16 %v299
    %v339 = vpack.c.b16 %v324, %v323
    %v340 = vpack.c.b16 %v326, %v325
    %v341 = vpack.c.b16 %v328, %v327
    %v342 = vpack.c.b16 %v330, %v329
    %v343 = vpack.c.b16 %v332, %v331
    %v344 = vpack.c.b16 %v334, %v333
    %v345 = vpack.c.b16 %v336, %v335
    %v346 = vpack.c.b16 %v338, %v337
    %355 = vmatprep.subr.bf16.mxu0 0
    %356 = vmatpush1.bf16.msra.mxu0 %v339
    %357 = vmatprep.subr.bf16.mxu0 0
    %358 = vmatpush1.bf16.msra.mxu0 %v340
    %359 = vmatprep.subr.bf16.mxu0 0
    %360 = vmatpush1.bf16.msra.mxu0 %v341
    %361 = vmatprep.subr.bf16.mxu0 0
    %362 = vmatpush1.bf16.msra.mxu0 %v342
    %363 = vmatprep.subr.bf16.mxu0 0
    %364 = vmatpush1.bf16.msra.mxu0 %v343
    %365 = vmatprep.subr.bf16.mxu0 0
    %366 = vmatpush1.bf16.msra.mxu0 %v344
    %367 = vmatprep.subr.bf16.mxu0 0
    %368 = vmatpush1.bf16.msra.mxu0 %v345
    %369 = vmatprep.subr.bf16.mxu0 0
    %370 = vmatpush1.bf16.msra.mxu0 %v346
    %371 = vmatprep.subr.bf16.mxu0 0
    %372 = vmatpush1.bf16.msra.mxu0 0
    %373 = vmatprep.subr.bf16.mxu0 0
    %374 = vmatpush1.bf16.msra.mxu0 0
    %375 = vmatprep.subr.bf16.mxu0 0
    %376 = vmatpush1.bf16.msra.mxu0 0
    %377 = vmatprep.subr.bf16.mxu0 0
    %378 = vmatpush1.bf16.msra.mxu0 0
    %379 = vmatprep.subr.bf16.mxu0 0
    %380 = vmatpush1.bf16.msra.mxu0 0
    %381 = vmatprep.subr.bf16.mxu0 0
    %382 = vmatpush1.bf16.msra.mxu0 0
    %383 = vmatprep.subr.bf16.mxu0 0
    %384 = vmatpush1.bf16.msra.mxu0 0
    %385 = vmatprep.subr.bf16.mxu0 0
    %386 = vmatpush1.bf16.msra.mxu0 0
    %387 = vmatprep.mubr.bf16.mxu0 0
    %388 = vmatmul.mubr.bf16.gmra.mrb[0].mxu0 %v283
    %v389 = vpop.f32.mrb[0].mxu0
    %v390 = vadd.f32 %v305, %v389
    %v391 = vpop.f32.mrb[0].mxu0
    %v392 = vpop.f32.mrb[0].mxu0
    %v393 = vadd.f32 %v305, %v392
    %v394 = vpop.f32.mrb[0].mxu0
    %395 = vdwg.mxu0
    %v396 = vmax.f32 %v390, 0.0
    %v397 = vmax.f32 %v393, 0.0
    %v398 = vpack.c.bf16 %v397, %v396
    %v399 = vld [vmem:[%s7] sm:$0xf]
    %v400 = vld [vmem:[%s7 + $0x4] sm:$0xf]
    %v401 = vld [vmem:[%s8] sm:$0xff]
    %v402 = vld [vmem:[%s8 + $0x8] sm:$0xff]
    %404 = vset.pattern.permute.xlu0 0
    %405 = vperm.xlu0 %404, %v401
    %v406 = vpop.permute.xlu0 %405
    %409 = vset.pattern.permute.xlu0 0
    %410 = vperm.xlu0 %409, %v402
    %v411 = vpop.permute.xlu0 %410
    %v414 = vunpack.c.l.b16 %v399
    %v415 = vunpack.c.l.b16 %v400
    %v416 = vpack.c.b16 %v415, %v414
    %418 = vmatprep.subr.bf16.mxu0 0
    %419 = vmatpush1.bf16.xpose.msra.mxu0 %v398
    %420 = vmatprep.subr.bf16.mxu0 0
    %421 = vmatpush1.bf16.xpose.msra.mxu0 0
    %422 = vmatprep.subr.bf16.mxu0 0
    %423 = vmatpush1.bf16.xpose.msra.mxu0 0
    %424 = vmatprep.subr.bf16.mxu0 0
    %425 = vmatpush1.bf16.xpose.msra.mxu0 0
    %426 = vmatprep.subr.bf16.mxu0 0
    %427 = vmatpush1.bf16.xpose.msra.mxu0 0
    %428 = vmatprep.subr.bf16.mxu0 0
    %429 = vmatpush1.bf16.xpose.msra.mxu0 0
    %430 = vmatprep.subr.bf16.mxu0 0
    %431 = vmatpush1.bf16.xpose.msra.mxu0 0
    %432 = vmatprep.subr.bf16.mxu0 0
    %433 = vmatpush1.bf16.xpose.msra.mxu0 0
    %434 = vmatprep.subr.bf16.mxu0 0
    %435 = vmatpush1.bf16.xpose.msra.mxu0 0
    %436 = vmatprep.subr.bf16.mxu0 0
    %437 = vmatpush1.bf16.xpose.msra.mxu0 0
    %438 = vmatprep.subr.bf16.mxu0 0
    %439 = vmatpush1.bf16.xpose.msra.mxu0 0
    %440 = vmatprep.subr.bf16.mxu0 0
    %441 = vmatpush1.bf16.xpose.msra.mxu0 0
    %442 = vmatprep.subr.bf16.mxu0 0
    %443 = vmatpush1.bf16.xpose.msra.mxu0 0
    %444 = vmatprep.subr.bf16.mxu0 0
    %445 = vmatpush1.bf16.xpose.msra.mxu0 0
    %446 = vmatprep.subr.bf16.mxu0 0
    %447 = vmatpush1.bf16.xpose.msra.mxu0 0
    %448 = vmatprep.subr.bf16.mxu0 0
    %449 = vmatpush1.bf16.xpose.msra.mxu0 0
    %450 = vmatprep.mubr.bf16.mxu0 0
    %451 = vmatmul.mubr.bf16.gmra.mrb[0].mxu0 %v416
    %v452 = vpop.f32.mrb[0].mxu0
    %v453 = vadd.f32 %v406, %v452
    %v454 = vpop.f32.mrb[0].mxu0
    %v455 = vpop.f32.mrb[0].mxu0
    %v456 = vpop.f32.mrb[0].mxu0
    %457 = vdwg.mxu0
    %vm458 = vcmask 122880
    %459 = vst.msk [vmem:[#allocation8] sm:$0x1] %vm458, %v453
    // Predicated region
    $region50: #{tpu_custom_call.1} parent=1 // pred_check
      _
    $region51: #{tpu_custom_call.1} parent=1 // pred_check_branch
      %461 = sbr.rel (0) target = $region53
    $region52: #{tpu_custom_call.1} parent=1 // pred_region
      %s463 = ssub.s32 16, 16
      %464 = vsyncadd [#allocation4], %s463
      %s466 = sshll.u32 [#allocation8], 4
      %s467 = int_to_ptr.vmem [resolvable:$true] %s466
      %469 = dma.vmem_to_hbm [thread:$0]  %s467, 16, %s9, [#allocation4]
    $region53: #{tpu_custom_call.1} parent=1 // pred_fallthru
      _
    // Predicated region
    $region54: #{tpu_custom_call.1} parent=1 // pred_check
      _
    $region55: #{tpu_custom_call.1} parent=1 // pred_check_branch
      %471 = sbr.rel (0) target = $region57
    $region56: #{tpu_custom_call.1} parent=1 // pred_region
      %472 = dma.done [#allocation4], 16
    $region57: #{tpu_custom_call.1} parent=1 // pred_fallthru
      _
    %473 = vsyncpa [#allocation3], 1
    %474 = vsyncpa [#allocation6], 1
    %475 = vsyncpa [#allocation4], 1

</llo_original>
